<compile_context>
chip_gen: v5e
topology: v5e:2x2
jax: 0.10.0
libtpu: 0.0.40
codegen_flags: <defaults>
</compile_context>

<pallas_src>
import functools

import jax
import jax.numpy as jnp
from jax import lax
from jax.experimental import pallas as pl
from jax.experimental.pallas import tpu as pltpu

_MiB = 1024 * 1024


def _apply_fb_kernel(fbT_ref, x_ref, o_ref, *, compute_dtype=None):
    # fbT_ref: (N, F)        -- filterbank transposed, resident across the grid
    # x_ref:   (BCt, F, Tt)  -- BCt (batch*channel) slices, one time tile
    # o_ref:   (BCt, N, Tt)
    fbT = fbT_ref[...]
    if compute_dtype is not None:
        fbT = fbT.astype(compute_dtype)

    def body(b, carry):
        xb = x_ref[b]
        if compute_dtype is not None:
            xb = xb.astype(compute_dtype)
        o_ref[b] = jnp.dot(
            fbT, xb, preferred_element_type=jnp.float32
        ).astype(o_ref.dtype)
        return carry

    # Real loop boundary for the scheduler (bounds live ranges), fully unrolled
    # for LLO visibility (BCt <= 8).
    lax.fori_loop(0, x_ref.shape[0], body, 0, unroll=True)


def apply_filterbank_pallas(mag_specgrams, filterbank, *,
                            bc_block=None, time_block=None,
                            vmem_budget_bytes=None,
                            mxu_compute_dtype=None):
    """mag_specgrams: (B, C, F, T); filterbank: (F, N) -> (B, C, N, T)."""
    B, C, F, T = mag_specgrams.shape
    Fk, N = filterbank.shape
    assert Fk == F, "filterbank num_freqs mismatch"

    BC = B * C
    out_dtype = mag_specgrams.dtype
    # Match the filterbank dtype to the spectrogram so the MXU sees one dtype
    # (prevents silent per-step promotion of the big (F, Tt) operand).
    fbT = filterbank.T.astype(out_dtype)            # (N, F)
    x = mag_specgrams.reshape(BC, F, T)
    isz = jnp.dtype(out_dtype).itemsize

    # ---- generation-aware VMEM capacity / budget -----------------------------
    try:
        vmem_cap = int(pltpu.get_tpu_info().vmem_capacity_bytes)
    except Exception:
        vmem_cap = 64 * _MiB        # conservative fallback (matches v7x)

    if vmem_budget_bytes is None:
        # v5e/v6e (128 MiB physical): 64 MiB budget -> Tt lands at 512-1024.
        # v7x (64 MiB physical): 48 MiB budget; Tt bought by shrinking BCt.
        vmem_budget_bytes = max(32 * _MiB, min(vmem_cap - 16 * _MiB, 64 * _MiB))

    fb_bytes = N * F * isz          # single-buffered (constant index_map)

    # ---- BCt / Tt selection: prefer lane-dense Tt (>=512) before big BCt -----
    if bc_block is not None:
        assert BC % bc_block == 0, "bc_block must divide batch*channel"
        bc_candidates = [bc_block]
    else:
        bc_candidates = [d for d in range(min(8, BC), 0, -1) if BC % d == 0]

    if time_block is not None:
        assert time_block == T or (time_block % 128 == 0 and time_block <= T), \
            "time_block must be T or a multiple of 128 <= T"
        tt_for = lambda bct: time_block
    elif T <= 128:
        tt_for = lambda bct: T                      # full-dim block (allowed)
    else:
        t_cap = min(2048, (T // 128) * 128)

        def tt_for(bct):
            per_col = 2 * bct * (F + N) * isz       # double-buffered in + out
            avail = max(0, vmem_budget_bytes - fb_bytes)
            tt = (avail // per_col // 128) * 128
            return int(max(128, min(t_cap, tt)))

    best = None
    for bct in bc_candidates:
        tt = tt_for(bct)
        # primary: reach a 512-wide lane tile; secondary: per-step work.
        score = (min(tt, 512), bct * min(tt, 2048))
        if best is None or score > best[0]:
            best = (score, bct, tt)
    _, BCt, Tt = best

    grid_bc = BC // BCt
    grid_t = pl.cdiv(T, Tt)

    # v7x has 2 TensorCores: avoid a degenerate (1, 1) grid when we can split.
    if grid_bc == 1 and grid_t == 1:
        if BCt > 1 and bc_block is None:
            for cand in range(BCt - 1, 0, -1):
                if BC % cand == 0:
                    BCt = cand
                    break
            grid_bc = BC // BCt
        elif T > 128 and time_block is None:
            Tt = max(128, ((Tt // 2) // 128) * 128)
            grid_t = pl.cdiv(T, Tt)

    # ---- VMEM limit: what the tiles need + margin, never below the need ------
    vmem_est = 2 * BCt * Tt * (F + N) * isz + fb_bytes
    vmem_limit = int(min(max(vmem_est + 12 * _MiB, 32 * _MiB),
                         vmem_cap - 8 * _MiB))
    vmem_limit = int(max(vmem_limit, vmem_est + 4 * _MiB))

    cost = pl.CostEstimate(
        flops=2 * BC * N * F * T,
        transcendentals=0,
        bytes_accessed=BC * F * T * isz + BC * N * T * isz + N * F * isz,
    )

    def build(single_buffer_fb):
        if single_buffer_fb:
            fb_spec = pl.BlockSpec((N, F), lambda i, j: (0, 0),
                                   pipeline_mode=pl.Buffered(1))
        else:
            fb_spec = pl.BlockSpec((N, F), lambda i, j: (0, 0))
        return pl.pallas_call(
            functools.partial(_apply_fb_kernel, compute_dtype=mxu_compute_dtype),
            out_shape=jax.ShapeDtypeStruct((BC, N, T), out_dtype),
            grid_spec=pltpu.PrefetchScalarGridSpec(
                num_scalar_prefetch=0,
                grid=(grid_bc, grid_t),
                in_specs=[
                    fb_spec,                                           # fb^T, resident
                    pl.BlockSpec((BCt, F, Tt), lambda i, j: (i, 0, j)),  # x tile
                ],
                out_specs=pl.BlockSpec((BCt, N, Tt), lambda i, j: (i, 0, j)),
            ),
            compiler_params=pltpu.CompilerParams(
                dimension_semantics=("parallel", "parallel"),
                vmem_limit_bytes=vmem_limit,
            ),
            cost_estimate=cost,
        )

    try:
        # Constant index_map -> second pipeline buffer for fb^T is dead weight.
        out = build(True)(fbT, x)
    except Exception:
        # Fallback if this Pallas build rejects Buffered(1): identical math,
        # default double-buffered filterbank spec.
        out = build(False)(fbT, x)

    return out.reshape(B, C, N, T)


if __name__ == "__main__":
    key = jax.random.PRNGKey(0)
    k_x, k_fb = jax.random.split(key)

    # Small shapes consistent with the module's forward:
    # mag_specgrams (batch, channel, num_freqs, time), filterbank (num_freqs, num_bands)
    B, C, F, T, N = 2, 4, 64, 256, 16

    mag = jax.random.uniform(k_x, (B, C, F, T), dtype=jnp.float32)
    fb = jax.random.uniform(k_fb, (F, N), dtype=jnp.float32)

    ref = jnp.einsum("bcft,fn->bcnt", mag, fb)

    # default (auto-sized) tiling — exercises the (1,1)-grid split guard too
    out = jax.block_until_ready(apply_filterbank_pallas(mag, fb))
    assert out.shape == (B, C, N, T)
    assert jnp.allclose(out, ref, atol=1e-4, rtol=1e-4)

    # explicit multi-block tiling: exercises both grid axes / index maps
    out2 = jax.block_until_ready(
        apply_filterbank_pallas(mag, fb, bc_block=4, time_block=128))
    assert jnp.allclose(out2, ref, atol=1e-4, rtol=1e-4)

    # small-T path (T < 128 -> full-T block), matching the original example
    T2 = 32
    mag_s = jax.random.uniform(k_x, (B, C, F, T2), dtype=jnp.float32)
    ref_s = jnp.einsum("bcft,fn->bcnt", mag_s, fb)
    out_s = jax.block_until_ready(apply_filterbank_pallas(mag_s, fb))
    assert jnp.allclose(out_s, ref_s, atol=1e-4, rtol=1e-4)

    # TODO(synk): on v5e, pass mxu_compute_dtype=jnp.bfloat16 (or bf16 inputs)
    # to stay HBM-bound; left off by default to keep exact f32 numerics.

    print("KERNEL_OK")
</pallas_src>

<mosaic_0001>
module attributes {stable_mosaic.version = 11 : i64} {
  func.func @_apply_fb_kernel(%arg0: i32, %arg1: i32, %arg2: memref<16x64xf32, #tpu.memory_space<vmem>>, %arg3: memref<4x64x256xf32, #tpu.memory_space<vmem>>, %arg4: memref<4x16x256xf32, #tpu.memory_space<vmem>>) attributes {dimension_semantics = [#tpu.dimension_semantics<parallel>, #tpu.dimension_semantics<parallel>], iteration_bounds = array<i64: 2, 1>, scalar_prefetch = 0 : i64, scratch_operands = 0 : i64, tpu.core_type = #tpu.core_type<tc>, window_params = [{pipeline_mode = #tpu.pipeline_mode<synchronous>, transform_indices = @transform_0, window_bounds = array<i64: 16, 64>}, {transform_indices = @transform_1, window_bounds = array<i64: 4, 64, 256>}, {transform_indices = @transform_2, window_bounds = array<i64: 4, 16, 256>}]} {
    %c0 = arith.constant 0 : index
    %c0_0 = arith.constant 0 : index
    %0 = vector.load %arg2[%c0, %c0_0] : memref<16x64xf32, #tpu.memory_space<vmem>>, vector<16x64xf32>
    %c0_i32 = arith.constant 0 : i32
    %1 = arith.index_cast %c0_i32 : i32 to index
    %c0_1 = arith.constant 0 : index
    %c0_2 = arith.constant 0 : index
    %2 = vector.load %arg3[%1, %c0_1, %c0_2] : memref<4x64x256xf32, #tpu.memory_space<vmem>>, vector<1x64x256xf32>
    %3 = vector.shape_cast %2 : vector<1x64x256xf32> to vector<64x256xf32>
    %cst = arith.constant dense<0.000000e+00> : vector<16x256xf32>
    %4 = tpu.matmul %0, %3, %cst {dimension_numbers = #tpu.dot_dimension_numbers<[1], [0], [0], [1], [0, 0, 1, 1], [], []>} : vector<16x64xf32>, vector<64x256xf32>, vector<16x256xf32> -> vector<16x256xf32>
    %5 = arith.index_cast %c0_i32 : i32 to index
    %c0_3 = arith.constant 0 : index
    %c0_4 = arith.constant 0 : index
    %6 = vector.load %arg4[%5, %c0_3, %c0_4] : memref<4x16x256xf32, #tpu.memory_space<vmem>>, vector<1x16x256xf32>
    %7 = vector.shape_cast %6 : vector<1x16x256xf32> to vector<16x256xf32>
    %8 = vector.shape_cast %4 : vector<16x256xf32> to vector<1x16x256xf32>
    tpu.vector_store %arg4[%5, %c0_3, %c0_4], %8 {strides = array<i32>} : memref<4x16x256xf32, #tpu.memory_space<vmem>>, vector<1x16x256xf32>,
    %c1_i32 = arith.constant 1 : i32
    %9 = arith.index_cast %c1_i32 : i32 to index
    %c0_5 = arith.constant 0 : index
    %c0_6 = arith.constant 0 : index
    %10 = vector.load %arg3[%9, %c0_5, %c0_6] : memref<4x64x256xf32, #tpu.memory_space<vmem>>, vector<1x64x256xf32>
    %11 = vector.shape_cast %10 : vector<1x64x256xf32> to vector<64x256xf32>
    %cst_7 = arith.constant dense<0.000000e+00> : vector<16x256xf32>
    %12 = tpu.matmul %0, %11, %cst_7 {dimension_numbers = #tpu.dot_dimension_numbers<[1], [0], [0], [1], [0, 0, 1, 1], [], []>} : vector<16x64xf32>, vector<64x256xf32>, vector<16x256xf32> -> vector<16x256xf32>
    %13 = arith.index_cast %c1_i32 : i32 to index
    %c0_8 = arith.constant 0 : index
    %c0_9 = arith.constant 0 : index
    %14 = vector.load %arg4[%13, %c0_8, %c0_9] : memref<4x16x256xf32, #tpu.memory_space<vmem>>, vector<1x16x256xf32>
    %15 = vector.shape_cast %14 : vector<1x16x256xf32> to vector<16x256xf32>
    %16 = vector.shape_cast %12 : vector<16x256xf32> to vector<1x16x256xf32>
    tpu.vector_store %arg4[%13, %c0_8, %c0_9], %16 {strides = array<i32>} : memref<4x16x256xf32, #tpu.memory_space<vmem>>, vector<1x16x256xf32>,
    %c2_i32 = arith.constant 2 : i32
    %17 = arith.index_cast %c2_i32 : i32 to index
    %c0_10 = arith.constant 0 : index
    %c0_11 = arith.constant 0 : index
    %18 = vector.load %arg3[%17, %c0_10, %c0_11] : memref<4x64x256xf32, #tpu.memory_space<vmem>>, vector<1x64x256xf32>
    %19 = vector.shape_cast %18 : vector<1x64x256xf32> to vector<64x256xf32>
    %cst_12 = arith.constant dense<0.000000e+00> : vector<16x256xf32>
    %20 = tpu.matmul %0, %19, %cst_12 {dimension_numbers = #tpu.dot_dimension_numbers<[1], [0], [0], [1], [0, 0, 1, 1], [], []>} : vector<16x64xf32>, vector<64x256xf32>, vector<16x256xf32> -> vector<16x256xf32>
    %21 = arith.index_cast %c2_i32 : i32 to index
    %c0_13 = arith.constant 0 : index
    %c0_14 = arith.constant 0 : index
    %22 = vector.load %arg4[%21, %c0_13, %c0_14] : memref<4x16x256xf32, #tpu.memory_space<vmem>>, vector<1x16x256xf32>
    %23 = vector.shape_cast %22 : vector<1x16x256xf32> to vector<16x256xf32>
    %24 = vector.shape_cast %20 : vector<16x256xf32> to vector<1x16x256xf32>
    tpu.vector_store %arg4[%21, %c0_13, %c0_14], %24 {strides = array<i32>} : memref<4x16x256xf32, #tpu.memory_space<vmem>>, vector<1x16x256xf32>,
    %c3_i32 = arith.constant 3 : i32
    %25 = arith.index_cast %c3_i32 : i32 to index
    %c0_15 = arith.constant 0 : index
    %c0_16 = arith.constant 0 : index
    %26 = vector.load %arg3[%25, %c0_15, %c0_16] : memref<4x64x256xf32, #tpu.memory_space<vmem>>, vector<1x64x256xf32>
    %27 = vector.shape_cast %26 : vector<1x64x256xf32> to vector<64x256xf32>
    %cst_17 = arith.constant dense<0.000000e+00> : vector<16x256xf32>
    %28 = tpu.matmul %0, %27, %cst_17 {dimension_numbers = #tpu.dot_dimension_numbers<[1], [0], [0], [1], [0, 0, 1, 1], [], []>} : vector<16x64xf32>, vector<64x256xf32>, vector<16x256xf32> -> vector<16x256xf32>
    %29 = arith.index_cast %c3_i32 : i32 to index
    %c0_18 = arith.constant 0 : index
    %c0_19 = arith.constant 0 : index
    %30 = vector.load %arg4[%29, %c0_18, %c0_19] : memref<4x16x256xf32, #tpu.memory_space<vmem>>, vector<1x16x256xf32>
    %31 = vector.shape_cast %30 : vector<1x16x256xf32> to vector<16x256xf32>
    %32 = vector.shape_cast %28 : vector<16x256xf32> to vector<1x16x256xf32>
    tpu.vector_store %arg4[%29, %c0_18, %c0_19], %32 {strides = array<i32>} : memref<4x16x256xf32, #tpu.memory_space<vmem>>, vector<1x16x256xf32>,
    %c4_i32 = arith.constant 4 : i32
    return
  }
  func.func @transform_0(%arg0: i32, %arg1: i32) -> (i32, i32) {
    %c0_i32 = arith.constant 0 : i32
    %c0_i32_0 = arith.constant 0 : i32
    %c0_i32_1 = arith.constant 0 : i32
    return %c0_i32, %c0_i32_0 : i32, i32
  }
  func.func @transform_1(%arg0: i32, %arg1: i32) -> (i32, i32, i32) {
    %c0_i32 = arith.constant 0 : i32
    %c0_i32_0 = arith.constant 0 : i32
    return %arg0, %c0_i32, %arg1 : i32, i32, i32
  }
  func.func @transform_2(%arg0: i32, %arg1: i32) -> (i32, i32, i32) {
    %c0_i32 = arith.constant 0 : i32
    %c0_i32_0 = arith.constant 0 : i32
    return %arg0, %c0_i32, %arg1 : i32, i32, i32
  }
}

module attributes {stable_mosaic.version = 11 : i64} {
  func.func @_apply_fb_kernel(%arg0: i32, %arg1: i32, %arg2: memref<16x64xf32, #tpu.memory_space<vmem>>, %arg3: memref<4x64x256xf32, #tpu.memory_space<vmem>>, %arg4: memref<4x16x256xf32, #tpu.memory_space<vmem>>) attributes {dimension_semantics = [#tpu.dimension_semantics<parallel>, #tpu.dimension_semantics<parallel>], iteration_bounds = array<i64: 2, 1>, scalar_prefetch = 0 : i64, scratch_operands = 0 : i64, tpu.core_type = #tpu.core_type<tc>, window_params = [{pipeline_mode = #tpu.pipeline_mode<synchronous>, transform_indices = @transform_0, window_bounds = array<i64: 16, 64>}, {transform_indices = @transform_1, window_bounds = array<i64: 4, 64, 256>}, {transform_indices = @transform_2, window_bounds = array<i64: 4, 16, 256>}]} {
    %c0 = arith.constant 0 : index
    %c0_0 = arith.constant 0 : index
    %0 = vector.load %arg2[%c0, %c0_0] : memref<16x64xf32, #tpu.memory_space<vmem>>, vector<16x64xf32>
    %c0_i32 = arith.constant 0 : i32
    %1 = arith.index_cast %c0_i32 : i32 to index
    %c0_1 = arith.constant 0 : index
    %c0_2 = arith.constant 0 : index
    %2 = vector.load %arg3[%1, %c0_1, %c0_2] : memref<4x64x256xf32, #tpu.memory_space<vmem>>, vector<1x64x256xf32>
    %3 = vector.shape_cast %2 : vector<1x64x256xf32> to vector<64x256xf32>
    %cst = arith.constant dense<0.000000e+00> : vector<16x256xf32>
    %4 = tpu.matmul %0, %3, %cst {dimension_numbers = #tpu.dot_dimension_numbers<[1], [0], [0], [1], [0, 0, 1, 1], [], []>} : vector<16x64xf32>, vector<64x256xf32>, vector<16x256xf32> -> vector<16x256xf32>
    %5 = arith.index_cast %c0_i32 : i32 to index
    %c0_3 = arith.constant 0 : index
    %c0_4 = arith.constant 0 : index
    %6 = vector.load %arg4[%5, %c0_3, %c0_4] : memref<4x16x256xf32, #tpu.memory_space<vmem>>, vector<1x16x256xf32>
    %7 = vector.shape_cast %6 : vector<1x16x256xf32> to vector<16x256xf32>
    %8 = vector.shape_cast %4 : vector<16x256xf32> to vector<1x16x256xf32>
    tpu.vector_store %arg4[%5, %c0_3, %c0_4], %8 {strides = array<i32>} : memref<4x16x256xf32, #tpu.memory_space<vmem>>, vector<1x16x256xf32>,
    %c1_i32 = arith.constant 1 : i32
    %9 = arith.index_cast %c1_i32 : i32 to index
    %c0_5 = arith.constant 0 : index
    %c0_6 = arith.constant 0 : index
    %10 = vector.load %arg3[%9, %c0_5, %c0_6] : memref<4x64x256xf32, #tpu.memory_space<vmem>>, vector<1x64x256xf32>
    %11 = vector.shape_cast %10 : vector<1x64x256xf32> to vector<64x256xf32>
    %cst_7 = arith.constant dense<0.000000e+00> : vector<16x256xf32>
    %12 = tpu.matmul %0, %11, %cst_7 {dimension_numbers = #tpu.dot_dimension_numbers<[1], [0], [0], [1], [0, 0, 1, 1], [], []>} : vector<16x64xf32>, vector<64x256xf32>, vector<16x256xf32> -> vector<16x256xf32>
    %13 = arith.index_cast %c1_i32 : i32 to index
    %c0_8 = arith.constant 0 : index
    %c0_9 = arith.constant 0 : index
    %14 = vector.load %arg4[%13, %c0_8, %c0_9] : memref<4x16x256xf32, #tpu.memory_space<vmem>>, vector<1x16x256xf32>
    %15 = vector.shape_cast %14 : vector<1x16x256xf32> to vector<16x256xf32>
    %16 = vector.shape_cast %12 : vector<16x256xf32> to vector<1x16x256xf32>
    tpu.vector_store %arg4[%13, %c0_8, %c0_9], %16 {strides = array<i32>} : memref<4x16x256xf32, #tpu.memory_space<vmem>>, vector<1x16x256xf32>,
    %c2_i32 = arith.constant 2 : i32
    %17 = arith.index_cast %c2_i32 : i32 to index
    %c0_10 = arith.constant 0 : index
    %c0_11 = arith.constant 0 : index
    %18 = vector.load %arg3[%17, %c0_10, %c0_11] : memref<4x64x256xf32, #tpu.memory_space<vmem>>, vector<1x64x256xf32>
    %19 = vector.shape_cast %18 : vector<1x64x256xf32> to vector<64x256xf32>
    %cst_12 = arith.constant dense<0.000000e+00> : vector<16x256xf32>
    %20 = tpu.matmul %0, %19, %cst_12 {dimension_numbers = #tpu.dot_dimension_numbers<[1], [0], [0], [1], [0, 0, 1, 1], [], []>} : vector<16x64xf32>, vector<64x256xf32>, vector<16x256xf32> -> vector<16x256xf32>
    %21 = arith.index_cast %c2_i32 : i32 to index
    %c0_13 = arith.constant 0 : index
    %c0_14 = arith.constant 0 : index
    %22 = vector.load %arg4[%21, %c0_13, %c0_14] : memref<4x16x256xf32, #tpu.memory_space<vmem>>, vector<1x16x256xf32>
    %23 = vector.shape_cast %22 : vector<1x16x256xf32> to vector<16x256xf32>
    %24 = vector.shape_cast %20 : vector<16x256xf32> to vector<1x16x256xf32>
    tpu.vector_store %arg4[%21, %c0_13, %c0_14], %24 {strides = array<i32>} : memref<4x16x256xf32, #tpu.memory_space<vmem>>, vector<1x16x256xf32>,
    %c3_i32 = arith.constant 3 : i32
    %25 = arith.index_cast %c3_i32 : i32 to index
    %c0_15 = arith.constant 0 : index
    %c0_16 = arith.constant 0 : index
    %26 = vector.load %arg3[%25, %c0_15, %c0_16] : memref<4x64x256xf32, #tpu.memory_space<vmem>>, vector<1x64x256xf32>
    %27 = vector.shape_cast %26 : vector<1x64x256xf32> to vector<64x256xf32>
    %cst_17 = arith.constant dense<0.000000e+00> : vector<16x256xf32>
    %28 = tpu.matmul %0, %27, %cst_17 {dimension_numbers = #tpu.dot_dimension_numbers<[1], [0], [0], [1], [0, 0, 1, 1], [], []>} : vector<16x64xf32>, vector<64x256xf32>, vector<16x256xf32> -> vector<16x256xf32>
    %29 = arith.index_cast %c3_i32 : i32 to index
    %c0_18 = arith.constant 0 : index
    %c0_19 = arith.constant 0 : index
    %30 = vector.load %arg4[%29, %c0_18, %c0_19] : memref<4x16x256xf32, #tpu.memory_space<vmem>>, vector<1x16x256xf32>
    %31 = vector.shape_cast %30 : vector<1x16x256xf32> to vector<16x256xf32>
    %32 = vector.shape_cast %28 : vector<16x256xf32> to vector<1x16x256xf32>
    tpu.vector_store %arg4[%29, %c0_18, %c0_19], %32 {strides = array<i32>} : memref<4x16x256xf32, #tpu.memory_space<vmem>>, vector<1x16x256xf32>,
    %c4_i32 = arith.constant 4 : i32
    return
  }
  func.func @transform_0(%arg0: i32, %arg1: i32) -> (i32, i32) {
    %c0_i32 = arith.constant 0 : i32
    %c0_i32_0 = arith.constant 0 : i32
    %c0_i32_1 = arith.constant 0 : i32
    return %c0_i32, %c0_i32_0 : i32, i32
  }
  func.func @transform_1(%arg0: i32, %arg1: i32) -> (i32, i32, i32) {
    %c0_i32 = arith.constant 0 : i32
    %c0_i32_0 = arith.constant 0 : i32
    return %arg0, %c0_i32, %arg1 : i32, i32, i32
  }
  func.func @transform_2(%arg0: i32, %arg1: i32) -> (i32, i32, i32) {
    %c0_i32 = arith.constant 0 : i32
    %c0_i32_0 = arith.constant 0 : i32
    return %arg0, %c0_i32, %arg1 : i32, i32, i32
  }
}

</mosaic_0001>

<llo_original>
// kernel: tpu_custom_call.1
$region0: #{tpu_custom_call.1}
  #allocation0 [shape = 'u32[]', space=smem, size = 0x4, offset = 0x4, fixed_abs, tag = 'smem constant byte address 0x4 - core index']
  #allocation1 [shape = 'u32[72,128]{1,0:T(1,128)}', space=vmem, size = 0x9000, scoped, tag = 'internal scratch']
  %s0 = inlined_call_operand.hbm [shape: f32[16,64], index: 0, kind: input, shape index: {}]
  %s1 = inlined_call_operand.hbm [shape: f32[8,64,256], index: 1, kind: input, shape index: {}]
  %s2 = inlined_call_operand.hbm [shape: f32[8,16,256], index: 2, kind: output, shape index: {}]
  %s3 = sld [smem:[#allocation0]]
  $region49: #{tpu_custom_call.1} parent=0
    _
  %s5 = ssub.s32 1, %s3
  %s6 = scalar_select 0, %s5, %s3
  $region1: #{tpu_custom_call.1} parent=0
    #allocation2 [shape = 'u8[8192]{0}', space=vmem, size = 0x2000, scoped, tag = 'input window, operand 0, single buffered']
    #allocation3 [shape = 's32[2]{0}', space=sflag, size = 0x8, scoped, tag = 'scoped memory for tpu_custom_call.1']
    #allocation4 [shape = 's32[2]{0}', space=sflag, size = 0x8, scoped, tag = 'scoped memory for tpu_custom_call.1']
    #allocation5 [shape = 'u8[524288]{0}', space=vmem, size = 0x80000, scoped, tag = 'input window, operand 1']
    #allocation6 [shape = 's32[2]{0}', space=sflag, size = 0x8, scoped, tag = 'scoped memory for tpu_custom_call.1']
    #allocation7 [shape = 'u8[131072]{0}', space=vmem, size = 0x20000, scoped, tag = 'output window, operand 0']
    %7 = vsyncpa [#allocation3], 0
    %8 = vsyncpa [#allocation6], 0
    %s9 = scalar_lea.sflag [#allocation6], 1
    %10 = vsyncpa %s9, 0
    %11 = vsyncpa [#allocation4], 0
    %s12 = scalar_lea.sflag [#allocation4], 1
    %13 = vsyncpa %s12, 0
    loop: start=0, step=1, limit=4
    $region2: #{tpu_custom_call.1} parent=1 // loop_pre_header
      _
    $region3: #{tpu_custom_call.1} parent=1 // loop_header
      %s15 = sphi 0, %s19
      %p16 = scmp.ge.s32.totalorder %s15, 4
      %s22 = sphi 0, %s34
      %s23 = sphi 0, %s30
      %s24 = sphi 0, %s22
      %s25 = sphi 0, %s23
      %s26 = sphi 0, %s24
      %s27 = sphi 0, %s25
      %s35 = sphi 0, %s35
      %s37 = sphi 0, %s35
      %s38 = sphi 0, %s37
      %s52 = sphi 0, %s38
      %s60 = sphi 0, %s62
      %s63 = sphi 0, %s60
      %s64 = sphi 0, %s63
      %s80 = sphi 0, %s64
      %s88 = sphi 0, %s90
      %s91 = sphi 0, %s88
      %s92 = sphi 0, %s91
      %s108 = sphi 0, %s92
    $region4: #{tpu_custom_call.1} parent=1 // loop_header_branch
      %18 = sbr.rel (%p16) target = $region8
    $region5: #{tpu_custom_call.1} parent=1 // loop_body
      %s20 = ssub.s32 %s15, 1
      %s21 = ssub.s32 %s15, 2
      %s28 = sadd.s32 1, %s23
      %p29 = scmp.ge.s32.totalorder %s28, 1
      %s30 = scalar_select %p29, 0, %s28
      %s31 = sadd.s32 1, %s22
      %s32 = scalar_select %p29, %s31, %s22
      %p33 = scmp.ge.s32.totalorder %s32, 2
      %s34 = scalar_select %p33, 0, %s32
      %s36 = sadd.s32 %s35, 1
      %p39 = scmp.eq.s32.totalorder %s15, 1
      %p40 = scmp.ne.s32.totalorder %s35, %s37
      %p41 = scmp.eq.s32.totalorder %s15, 0
      %p42 = por %p40, %p41
      %p43 = scmp.ne.s32.totalorder %s35, %s37
      %p44 = scmp.eq.s32.totalorder %s20, 1
      %p45 = por %p43, %p44
      %p46 = scmp.ne.s32.totalorder %s37, %s38
      %p47 = scmp.eq.s32.totalorder %s20, 0
      %p48 = por %p46, %p47
      %p49 = scmp.ne.s32.totalorder %s37, %s38
      %p50 = scmp.eq.s32.totalorder %s21, 1
      %p51 = por %p49, %p50
      %p53 = scmp.ne.s32.totalorder %s38, %s52
      %p54 = scmp.eq.s32.totalorder %s21, 0
      %p55 = por %p53, %p54
      %s56 = ssub.s32 %s22, %s34
      %s57 = ssub.s32 %s23, %s30
      %s58 = sor.u32 %s56, %s57
      %p59 = scmp.eq.s32.totalorder %s58, 0
      %s61 = sadd.s32 %s60, 1
      %s62 = scalar_select %p59, %s60, %s61
      %p65 = pneg %p59
      %p66 = scmp.eq.s32.totalorder %s15, 1
      %p67 = por %p65, %p66
      %p68 = scmp.ne.s32.totalorder %s60, %s63
      %p69 = scmp.eq.s32.totalorder %s15, 0
      %p70 = por %p68, %p69
      %p71 = scmp.ne.s32.totalorder %s60, %s63
      %p72 = scmp.eq.s32.totalorder %s20, 1
      %p73 = por %p71, %p72
      %p74 = scmp.ne.s32.totalorder %s63, %s64
      %p75 = scmp.eq.s32.totalorder %s20, 0
      %p76 = por %p74, %p75
      %p77 = scmp.ne.s32.totalorder %s63, %s64
      %p78 = scmp.eq.s32.totalorder %s21, 1
      %p79 = por %p77, %p78
      %p81 = scmp.ne.s32.totalorder %s64, %s80
      %p82 = scmp.eq.s32.totalorder %s21, 0
      %p83 = por %p81, %p82
      %s84 = ssub.s32 %s22, %s34
      %s85 = ssub.s32 %s23, %s30
      %s86 = sor.u32 %s84, %s85
      %p87 = scmp.eq.s32.totalorder %s86, 0
      %s89 = sadd.s32 %s88, 1
      %s90 = scalar_select %p87, %s88, %s89
      %p93 = pneg %p87
      %p94 = scmp.eq.s32.totalorder %s15, 1
      %p95 = por %p93, %p94
      %p96 = scmp.ne.s32.totalorder %s88, %s91
      %p97 = scmp.eq.s32.totalorder %s15, 0
      %p98 = por %p96, %p97
      %p99 = scmp.ne.s32.totalorder %s88, %s91
      %p100 = scmp.eq.s32.totalorder %s20, 1
      %p101 = por %p99, %p100
      %p102 = scmp.ne.s32.totalorder %s91, %s92
      %p103 = scmp.eq.s32.totalorder %s20, 0
      %p104 = por %p102, %p103
      %p105 = scmp.ne.s32.totalorder %s91, %s92
      %p106 = scmp.eq.s32.totalorder %s21, 1
      %p107 = por %p105, %p106
      %p109 = scmp.ne.s32.totalorder %s92, %s108
      %p110 = scmp.eq.s32.totalorder %s21, 0
      %p111 = por %p109, %p110
      %p112 = scmp.le.s32.totalorder 1, %s15
      %p113 = scmp.lt.s32.totalorder %s15, 3
      %p114 = pnand %p112, %p113
      %p115 = pneg %p114
      // Predicated region
      $region9: #{tpu_custom_call.1} parent=5 // pred_check
        _
      $region10: #{tpu_custom_call.1} parent=5 // pred_check_branch
        %117 = sbr.rel (%p114) target = $region12
      $region11: #{tpu_custom_call.1} parent=5 // pred_region
        %s118 = ssub.s32 %s15, 1
        // Predicated region
        $region13: #{tpu_custom_call.1} parent=11 // pred_check
          %p119 = pneg %p48
        $region14: #{tpu_custom_call.1} parent=11 // pred_check_branch
          %121 = sbr.rel (%p119) target = $region16
        $region15: #{tpu_custom_call.1} parent=11 // pred_region
          %123 = vsyncadd [#allocation3], 0
          %s124 = sshll.u32 %s0, 4
          %s125 = int_to_ptr.hbm [resolvable:$true] %s124
          %s126 = sshll.u32 [#allocation2], 4
          %s127 = int_to_ptr.vmem [resolvable:$true] %s126
          %132 = dma.hbm_to_vmem [thread:$0]  %s125, 256, %s127, [#allocation3], 128, 128, 8
        $region16: #{tpu_custom_call.1} parent=11 // pred_fallthru
          _
      $region12: #{tpu_custom_call.1} parent=5 // pred_fallthru
        _
      %p133 = scmp.lt.s32.totalorder %s15, 2
      // Predicated region
      $region17: #{tpu_custom_call.1} parent=5 // pred_check
        %p134 = pneg %p133
      $region18: #{tpu_custom_call.1} parent=5 // pred_check_branch
        %136 = sbr.rel (%p134) target = $region20
      $region19: #{tpu_custom_call.1} parent=5 // pred_region
        // Predicated region
        $region21: #{tpu_custom_call.1} parent=19 // pred_check
          %p137 = pneg %p70
        $region22: #{tpu_custom_call.1} parent=19 // pred_check_branch
          %139 = sbr.rel (%p137) target = $region24
        $region23: #{tpu_custom_call.1} parent=19 // pred_region
          %s140 = sand.u32 %s60, 1
          %s141 = scalar_lea.sflag [#allocation6], %s140
          %s142 = sand.u32 %s60, 1
          %s143 = smul.addr %s142, 512
          %s144 = scalar_lea.vmem [#allocation5], %s143
          %s145 = smul.u32 4, %s22
          %s146 = smul.u32 2, %s23
          %148 = vsyncadd %s141, 0
          %s149 = smul.addr %s145, 16
          %s150 = sadd.s32 %s146, %s149
          %s151 = smul.addr %s150, 8
          %s152 = scalar_lea.hbm %s1, %s151
          %s153 = sshll.u32 %s152, 4
          %s154 = int_to_ptr.hbm [resolvable:$true] %s153
          %s155 = sshll.u32 %s144, 4
          %s156 = int_to_ptr.vmem [resolvable:$true] %s155
          %161 = dma.hbm_to_vmem [thread:$0]  %s154, 8192, %s156, %s141, 256, 256, 16
        $region24: #{tpu_custom_call.1} parent=19 // pred_fallthru
          _
      $region20: #{tpu_custom_call.1} parent=5 // pred_fallthru
        _
      %p162 = scmp.le.s32.totalorder 1, %s15
      %p163 = scmp.lt.s32.totalorder %s15, 3
      %p164 = pnand %p162, %p163
      %p165 = pneg %p164
      // Predicated region
      $region25: #{tpu_custom_call.1} parent=5 // pred_check
        _
      $region26: #{tpu_custom_call.1} parent=5 // pred_check_branch
        %167 = sbr.rel (%p164) target = $region28
      $region27: #{tpu_custom_call.1} parent=5 // pred_region
        %s168 = ssub.s32 %s15, 1
        // Predicated region
        $region29: #{tpu_custom_call.1} parent=27 // pred_check
          %p169 = pneg %p48
        $region30: #{tpu_custom_call.1} parent=27 // pred_check_branch
          %171 = sbr.rel (%p169) target = $region32
        $region31: #{tpu_custom_call.1} parent=27 // pred_region
          %173 = dma.done [#allocation3], 256
        $region32: #{tpu_custom_call.1} parent=27 // pred_fallthru
          _
        %s174 = sand.u32 %s63, 1
        %s175 = scalar_lea.sflag [#allocation6], %s174
        %s176 = sand.u32 %s63, 1
        %s177 = smul.addr %s176, 512
        %s178 = scalar_lea.vmem [#allocation5], %s177
        // Predicated region
        $region33: #{tpu_custom_call.1} parent=27 // pred_check
          %p179 = pneg %p76
        $region34: #{tpu_custom_call.1} parent=27 // pred_check_branch
          %181 = sbr.rel (%p179) target = $region36
        $region35: #{tpu_custom_call.1} parent=27 // pred_region
          %183 = dma.done %s175, 8192
        $region36: #{tpu_custom_call.1} parent=27 // pred_fallthru
          _
        %p184 = pneg %p48
        %p185 = pneg %p45
        %s186 = sand.u32 %s63, 1
        %s187 = scalar_lea.sflag [#allocation6], %s186
        %s188 = sand.u32 %s63, 1
        %s189 = smul.addr %s188, 512
        %s190 = scalar_lea.vmem [#allocation5], %s189
        %p191 = pneg %p76
        %p192 = pneg %p73
        %p193 = pneg %p104
        %p194 = pneg %p101
        %s195 = sand.u32 %s91, 1
        %s196 = scalar_lea.sflag [#allocation4], %s195
        %s197 = sand.u32 %s91, 1
        %s198 = smul.addr %s197, 128
        %s199 = scalar_lea.vmem [#allocation7], %s198
        %s200 = smul.u32 4, %s24
        %s201 = smul.u32 2, %s25
        %s202 = smul.u32 4, %s24
        %s203 = smul.u32 2, %s25
        %v204 = vld [vmem:[#allocation2] sm:$0xff]
        %v205 = vld [vmem:[#allocation2 + $0x8] sm:$0xff]
        %v206 = vld [vmem:[%s178] sm:$0xff]
        %v207 = vld [vmem:[%s178 + $0x8] sm:$0xff]
        %v208 = vld [vmem:[%s178 + $0x10] sm:$0xff]
        %v209 = vld [vmem:[%s178 + $0x18] sm:$0xff]
        %v210 = vld [vmem:[%s178 + $0x20] sm:$0xff]
        %v211 = vld [vmem:[%s178 + $0x28] sm:$0xff]
        %v212 = vld [vmem:[%s178 + $0x30] sm:$0xff]
        %v213 = vld [vmem:[%s178 + $0x38] sm:$0xff]
        %v214 = vld [vmem:[%s178 + $0x40] sm:$0xff]
        %v215 = vld [vmem:[%s178 + $0x48] sm:$0xff]
        %v216 = vld [vmem:[%s178 + $0x50] sm:$0xff]
        %v217 = vld [vmem:[%s178 + $0x58] sm:$0xff]
        %v218 = vld [vmem:[%s178 + $0x60] sm:$0xff]
        %v219 = vld [vmem:[%s178 + $0x68] sm:$0xff]
        %v220 = vld [vmem:[%s178 + $0x70] sm:$0xff]
        %v221 = vld [vmem:[%s178 + $0x78] sm:$0xff]
        %vm222 = vcmask 523264
        %v224 = vsel %vm222, %v204, 0
        %v227 = vsel %vm222, %v205, 0
        %229 = vmatpush.msra.mxu0 0.0
        %230 = vmatpush.msra.mxu0 0.0
        %231 = vmatpush.msra.mxu0 0.0
        %232 = vmatpush.msra.mxu0 0.0
        %233 = vmatpush.msra.mxu0 0.0
        %234 = vmatpush.msra.mxu0 0.0
        %235 = vmatpush.msra.mxu0 0.0
        %236 = vmatpush.msra.mxu0 0.0
        %237 = vmatpush.msra.mxu0 %v220
        %238 = vmatpush.msra.mxu0 %v218
        %239 = vmatpush.msra.mxu0 %v216
        %240 = vmatpush.msra.mxu0 %v214
        %241 = vmatpush.msra.mxu0 %v212
        %242 = vmatpush.msra.mxu0 %v210
        %243 = vmatpush.msra.mxu0 %v208
        %244 = vmatpush.msra.mxu0 %v206
        %245 = vmatmul.f32.gmra.mxu0 %v224
        %v246 = vpop.f32.mrf.mxu0
        %v247 = vadd.f32 0.0, %v246
        %248 = vmatmul.f32.gmra.mxu0 %v227
        %v249 = vpop.f32.mrf.mxu0
        %v250 = vadd.f32 0.0, %v249
        %251 = vdwg.mxu0
        %252 = vmatpush.msra.mxu0 0.0
        %253 = vmatpush.msra.mxu0 0.0
        %254 = vmatpush.msra.mxu0 0.0
        %255 = vmatpush.msra.mxu0 0.0
        %256 = vmatpush.msra.mxu0 0.0
        %257 = vmatpush.msra.mxu0 0.0
        %258 = vmatpush.msra.mxu0 0.0
        %259 = vmatpush.msra.mxu0 0.0
        %260 = vmatpush.msra.mxu0 %v221
        %261 = vmatpush.msra.mxu0 %v219
        %262 = vmatpush.msra.mxu0 %v217
        %263 = vmatpush.msra.mxu0 %v215
        %264 = vmatpush.msra.mxu0 %v213
        %265 = vmatpush.msra.mxu0 %v211
        %266 = vmatpush.msra.mxu0 %v209
        %267 = vmatpush.msra.mxu0 %v207
        %268 = vmatmul.f32.gmra.mxu0 %v224
        %v269 = vpop.f32.mrf.mxu0
        %v270 = vadd.f32 0.0, %v269
        %271 = vmatmul.f32.gmra.mxu0 %v227
        %v272 = vpop.f32.mrf.mxu0
        %v273 = vadd.f32 0.0, %v272
        %274 = vdwg.mxu0
        %275 = vst [vmem:[%s199] sm:$0xff] %v247
        %276 = vst [vmem:[%s199 + $0x8] sm:$0xff] %v270
        %277 = vst [vmem:[%s199 + $0x10] sm:$0xff] %v250
        %278 = vst [vmem:[%s199 + $0x18] sm:$0xff] %v273
        %s279 = scalar_lea.vmem %s178, 128 [#allocation5]
        %v280 = vld [vmem:[%s279] sm:$0xff]
        %v281 = vld [vmem:[%s279 + $0x8] sm:$0xff]
        %v282 = vld [vmem:[%s279 + $0x10] sm:$0xff]
        %v283 = vld [vmem:[%s279 + $0x18] sm:$0xff]
        %v284 = vld [vmem:[%s279 + $0x20] sm:$0xff]
        %v285 = vld [vmem:[%s279 + $0x28] sm:$0xff]
        %v286 = vld [vmem:[%s279 + $0x30] sm:$0xff]
        %v287 = vld [vmem:[%s279 + $0x38] sm:$0xff]
        %v288 = vld [vmem:[%s279 + $0x40] sm:$0xff]
        %v289 = vld [vmem:[%s279 + $0x48] sm:$0xff]
        %v290 = vld [vmem:[%s279 + $0x50] sm:$0xff]
        %v291 = vld [vmem:[%s279 + $0x58] sm:$0xff]
        %v292 = vld [vmem:[%s279 + $0x60] sm:$0xff]
        %v293 = vld [vmem:[%s279 + $0x68] sm:$0xff]
        %v294 = vld [vmem:[%s279 + $0x70] sm:$0xff]
        %v295 = vld [vmem:[%s279 + $0x78] sm:$0xff]
        %296 = vmatpush.msra.mxu0 0.0
        %297 = vmatpush.msra.mxu0 0.0
        %298 = vmatpush.msra.mxu0 0.0
        %299 = vmatpush.msra.mxu0 0.0
        %300 = vmatpush.msra.mxu0 0.0
        %301 = vmatpush.msra.mxu0 0.0
        %302 = vmatpush.msra.mxu0 0.0
        %303 = vmatpush.msra.mxu0 0.0
        %304 = vmatpush.msra.mxu0 %v294
        %305 = vmatpush.msra.mxu0 %v292
        %306 = vmatpush.msra.mxu0 %v290
        %307 = vmatpush.msra.mxu0 %v288
        %308 = vmatpush.msra.mxu0 %v286
        %309 = vmatpush.msra.mxu0 %v284
        %310 = vmatpush.msra.mxu0 %v282
        %311 = vmatpush.msra.mxu0 %v280
        %312 = vmatmul.f32.gmra.mxu0 %v224
        %v313 = vpop.f32.mrf.mxu0
        %v314 = vadd.f32 0.0, %v313
        %315 = vmatmul.f32.gmra.mxu0 %v227
        %v316 = vpop.f32.mrf.mxu0
        %v317 = vadd.f32 0.0, %v316
        %318 = vdwg.mxu0
        %319 = vmatpush.msra.mxu0 0.0
        %320 = vmatpush.msra.mxu0 0.0
        %321 = vmatpush.msra.mxu0 0.0
        %322 = vmatpush.msra.mxu0 0.0
        %323 = vmatpush.msra.mxu0 0.0
        %324 = vmatpush.msra.mxu0 0.0
        %325 = vmatpush.msra.mxu0 0.0
        %326 = vmatpush.msra.mxu0 0.0
        %327 = vmatpush.msra.mxu0 %v295
        %328 = vmatpush.msra.mxu0 %v293
        %329 = vmatpush.msra.mxu0 %v291
        %330 = vmatpush.msra.mxu0 %v289
        %331 = vmatpush.msra.mxu0 %v287
        %332 = vmatpush.msra.mxu0 %v285
        %333 = vmatpush.msra.mxu0 %v283
        %334 = vmatpush.msra.mxu0 %v281
        %335 = vmatmul.f32.gmra.mxu0 %v224
        %v336 = vpop.f32.mrf.mxu0
        %v337 = vadd.f32 0.0, %v336
        %338 = vmatmul.f32.gmra.mxu0 %v227
        %v339 = vpop.f32.mrf.mxu0
        %v340 = vadd.f32 0.0, %v339
        %341 = vdwg.mxu0
        %s342 = scalar_lea.vmem %s199, 32 [#allocation7]
        %343 = vst [vmem:[%s342] sm:$0xff] %v314
        %344 = vst [vmem:[%s342 + $0x8] sm:$0xff] %v337
        %345 = vst [vmem:[%s342 + $0x10] sm:$0xff] %v317
        %346 = vst [vmem:[%s342 + $0x18] sm:$0xff] %v340
        %s347 = scalar_lea.vmem %s178, 256 [#allocation5]
        %v348 = vld [vmem:[%s347] sm:$0xff]
        %v349 = vld [vmem:[%s347 + $0x8] sm:$0xff]
        %v350 = vld [vmem:[%s347 + $0x10] sm:$0xff]
        %v351 = vld [vmem:[%s347 + $0x18] sm:$0xff]
        %v352 = vld [vmem:[%s347 + $0x20] sm:$0xff]
        %v353 = vld [vmem:[%s347 + $0x28] sm:$0xff]
        %v354 = vld [vmem:[%s347 + $0x30] sm:$0xff]
        %v355 = vld [vmem:[%s347 + $0x38] sm:$0xff]
        %v356 = vld [vmem:[%s347 + $0x40] sm:$0xff]
        %v357 = vld [vmem:[%s347 + $0x48] sm:$0xff]
        %v358 = vld [vmem:[%s347 + $0x50] sm:$0xff]
        %v359 = vld [vmem:[%s347 + $0x58] sm:$0xff]
        %v360 = vld [vmem:[%s347 + $0x60] sm:$0xff]
        %v361 = vld [vmem:[%s347 + $0x68] sm:$0xff]
        %v362 = vld [vmem:[%s347 + $0x70] sm:$0xff]
        %v363 = vld [vmem:[%s347 + $0x78] sm:$0xff]
        %364 = vmatpush.msra.mxu0 0.0
        %365 = vmatpush.msra.mxu0 0.0
        %366 = vmatpush.msra.mxu0 0.0
        %367 = vmatpush.msra.mxu0 0.0
        %368 = vmatpush.msra.mxu0 0.0
        %369 = vmatpush.msra.mxu0 0.0
        %370 = vmatpush.msra.mxu0 0.0
        %371 = vmatpush.msra.mxu0 0.0
        %372 = vmatpush.msra.mxu0 %v362
        %373 = vmatpush.msra.mxu0 %v360
        %374 = vmatpush.msra.mxu0 %v358
        %375 = vmatpush.msra.mxu0 %v356
        %376 = vmatpush.msra.mxu0 %v354
        %377 = vmatpush.msra.mxu0 %v352
        %378 = vmatpush.msra.mxu0 %v350
        %379 = vmatpush.msra.mxu0 %v348
        %380 = vmatmul.f32.gmra.mxu0 %v224
        %v381 = vpop.f32.mrf.mxu0
        %v382 = vadd.f32 0.0, %v381
        %383 = vmatmul.f32.gmra.mxu0 %v227
        %v384 = vpop.f32.mrf.mxu0
        %v385 = vadd.f32 0.0, %v384
        %386 = vdwg.mxu0
        %387 = vmatpush.msra.mxu0 0.0
        %388 = vmatpush.msra.mxu0 0.0
        %389 = vmatpush.msra.mxu0 0.0
        %390 = vmatpush.msra.mxu0 0.0
        %391 = vmatpush.msra.mxu0 0.0
        %392 = vmatpush.msra.mxu0 0.0
        %393 = vmatpush.msra.mxu0 0.0
        %394 = vmatpush.msra.mxu0 0.0
        %395 = vmatpush.msra.mxu0 %v363
        %396 = vmatpush.msra.mxu0 %v361
        %397 = vmatpush.msra.mxu0 %v359
        %398 = vmatpush.msra.mxu0 %v357
        %399 = vmatpush.msra.mxu0 %v355
        %400 = vmatpush.msra.mxu0 %v353
        %401 = vmatpush.msra.mxu0 %v351
        %402 = vmatpush.msra.mxu0 %v349
        %403 = vmatmul.f32.gmra.mxu0 %v224
        %v404 = vpop.f32.mrf.mxu0
        %v405 = vadd.f32 0.0, %v404
        %406 = vmatmul.f32.gmra.mxu0 %v227
        %v407 = vpop.f32.mrf.mxu0
        %v408 = vadd.f32 0.0, %v407
        %409 = vdwg.mxu0
        %s410 = scalar_lea.vmem %s199, 64 [#allocation7]
        %411 = vst [vmem:[%s410] sm:$0xff] %v382
        %412 = vst [vmem:[%s410 + $0x8] sm:$0xff] %v405
        %413 = vst [vmem:[%s410 + $0x10] sm:$0xff] %v385
        %414 = vst [vmem:[%s410 + $0x18] sm:$0xff] %v408
        %s415 = scalar_lea.vmem %s178, 384 [#allocation5]
        %v416 = vld [vmem:[%s415] sm:$0xff]
        %v417 = vld [vmem:[%s415 + $0x8] sm:$0xff]
        %v418 = vld [vmem:[%s415 + $0x10] sm:$0xff]
        %v419 = vld [vmem:[%s415 + $0x18] sm:$0xff]
        %v420 = vld [vmem:[%s415 + $0x20] sm:$0xff]
        %v421 = vld [vmem:[%s415 + $0x28] sm:$0xff]
        %v422 = vld [vmem:[%s415 + $0x30] sm:$0xff]
        %v423 = vld [vmem:[%s415 + $0x38] sm:$0xff]
        %v424 = vld [vmem:[%s415 + $0x40] sm:$0xff]
        %v425 = vld [vmem:[%s415 + $0x48] sm:$0xff]
        %v426 = vld [vmem:[%s415 + $0x50] sm:$0xff]
        %v427 = vld [vmem:[%s415 + $0x58] sm:$0xff]
        %v428 = vld [vmem:[%s415 + $0x60] sm:$0xff]
        %v429 = vld [vmem:[%s415 + $0x68] sm:$0xff]
        %v430 = vld [vmem:[%s415 + $0x70] sm:$0xff]
        %v431 = vld [vmem:[%s415 + $0x78] sm:$0xff]
        %432 = vmatpush.msra.mxu0 0.0
        %433 = vmatpush.msra.mxu0 0.0
        %434 = vmatpush.msra.mxu0 0.0
        %435 = vmatpush.msra.mxu0 0.0
        %436 = vmatpush.msra.mxu0 0.0
        %437 = vmatpush.msra.mxu0 0.0
        %438 = vmatpush.msra.mxu0 0.0
        %439 = vmatpush.msra.mxu0 0.0
        %440 = vmatpush.msra.mxu0 %v430
        %441 = vmatpush.msra.mxu0 %v428
        %442 = vmatpush.msra.mxu0 %v426
        %443 = vmatpush.msra.mxu0 %v424
        %444 = vmatpush.msra.mxu0 %v422
        %445 = vmatpush.msra.mxu0 %v420
        %446 = vmatpush.msra.mxu0 %v418
        %447 = vmatpush.msra.mxu0 %v416
        %448 = vmatmul.f32.gmra.mxu0 %v224
        %v449 = vpop.f32.mrf.mxu0
        %v450 = vadd.f32 0.0, %v449
        %451 = vmatmul.f32.gmra.mxu0 %v227
        %v452 = vpop.f32.mrf.mxu0
        %v453 = vadd.f32 0.0, %v452
        %454 = vdwg.mxu0
        %455 = vmatpush.msra.mxu0 0.0
        %456 = vmatpush.msra.mxu0 0.0
        %457 = vmatpush.msra.mxu0 0.0
        %458 = vmatpush.msra.mxu0 0.0
        %459 = vmatpush.msra.mxu0 0.0
        %460 = vmatpush.msra.mxu0 0.0
        %461 = vmatpush.msra.mxu0 0.0
        %462 = vmatpush.msra.mxu0 0.0
        %463 = vmatpush.msra.mxu0 %v431
        %464 = vmatpush.msra.mxu0 %v429
        %465 = vmatpush.msra.mxu0 %v427
        %466 = vmatpush.msra.mxu0 %v425
        %467 = vmatpush.msra.mxu0 %v423
        %468 = vmatpush.msra.mxu0 %v421
        %469 = vmatpush.msra.mxu0 %v419
        %470 = vmatpush.msra.mxu0 %v417
        %471 = vmatmul.f32.gmra.mxu0 %v224
        %v472 = vpop.f32.mrf.mxu0
        %v473 = vadd.f32 0.0, %v472
        %474 = vmatmul.f32.gmra.mxu0 %v227
        %v475 = vpop.f32.mrf.mxu0
        %v476 = vadd.f32 0.0, %v475
        %477 = vdwg.mxu0
        %s478 = scalar_lea.vmem %s199, 96 [#allocation7]
        %479 = vst [vmem:[%s478] sm:$0xff] %v450
        %480 = vst [vmem:[%s478 + $0x8] sm:$0xff] %v473
        %481 = vst [vmem:[%s478 + $0x10] sm:$0xff] %v453
        %482 = vst [vmem:[%s478 + $0x18] sm:$0xff] %v476
        %s483 = sand.u32 %s91, 1
        %s484 = scalar_lea.sflag [#allocation4], %s483
        %s485 = sand.u32 %s91, 1
        %s486 = smul.addr %s485, 128
        %s487 = scalar_lea.vmem [#allocation7], %s486
        // Predicated region
        $region37: #{tpu_custom_call.1} parent=27 // pred_check
          %p488 = pneg %p101
        $region38: #{tpu_custom_call.1} parent=27 // pred_check_branch
          %490 = sbr.rel (%p488) target = $region40
        $region39: #{tpu_custom_call.1} parent=27 // pred_region
          %s491 = smul.u32 4, %s24
          %s492 = smul.u32 2, %s25
          %494 = vsyncadd %s484, 0
          %s495 = smul.addr %s491, 4
          %s496 = sadd.s32 %s492, %s495
          %s497 = smul.addr %s496, 8
          %s498 = scalar_lea.hbm %s2, %s497
          %s499 = sshll.u32 %s487, 4
          %s500 = int_to_ptr.vmem [resolvable:$true] %s499
          %s501 = sshll.u32 %s498, 4
          %s502 = int_to_ptr.hbm [resolvable:$true] %s501
          %507 = dma.vmem_to_hbm [thread:$0]  %s500, 2048, %s502, %s484, 256, 256, 16
        $region40: #{tpu_custom_call.1} parent=27 // pred_fallthru
          _
      $region28: #{tpu_custom_call.1} parent=5 // pred_fallthru
        _
      %p508 = scmp.le.s32.totalorder 2, %s15
      // Predicated region
      $region41: #{tpu_custom_call.1} parent=5 // pred_check
        %p509 = pneg %p508
      $region42: #{tpu_custom_call.1} parent=5 // pred_check_branch
        %511 = sbr.rel (%p509) target = $region44
      $region43: #{tpu_custom_call.1} parent=5 // pred_region
        %s512 = ssub.s32 %s15, 2
        // Predicated region
        $region45: #{tpu_custom_call.1} parent=43 // pred_check
          %p513 = pneg %p107
        $region46: #{tpu_custom_call.1} parent=43 // pred_check_branch
          %515 = sbr.rel (%p513) target = $region48
        $region47: #{tpu_custom_call.1} parent=43 // pred_region
          %s516 = sand.u32 %s92, 1
          %s517 = scalar_lea.sflag [#allocation4], %s516
          %s518 = sand.u32 %s92, 1
          %s519 = smul.addr %s518, 128
          %s520 = scalar_lea.vmem [#allocation7], %s519
          %522 = dma.done %s517, 2048
        $region48: #{tpu_custom_call.1} parent=43 // pred_fallthru
          _
      $region44: #{tpu_custom_call.1} parent=5 // pred_fallthru
        _
    $region6: #{tpu_custom_call.1} parent=1 // loop_footer
      %s19 = sadd.s32 1, %s15
    $region7: #{tpu_custom_call.1} parent=1 // loop_footer_branch
      %14 = sbr.rel target = $region3
    $region8: #{tpu_custom_call.1} parent=1 // loop_exit
      _
    %523 = vsyncpa [#allocation3], 1
    %s524 = scalar_lea.sflag [#allocation3], 1
    %525 = vsyncpa %s524, 1
    %526 = vsyncpa [#allocation6], 1
    %s527 = scalar_lea.sflag [#allocation6], 1
    %528 = vsyncpa %s527, 1
    %529 = vsyncpa [#allocation4], 1
    %s530 = scalar_lea.sflag [#allocation4], 1
    %531 = vsyncpa %s530, 1

// kernel: tpu_custom_call.1
$region0: #{tpu_custom_call.1}
  #allocation0 [shape = 'u32[]', space=smem, size = 0x4, offset = 0x4, fixed_abs, tag = 'smem constant byte address 0x4 - core index']
  #allocation1 [shape = 'u32[72,128]{1,0:T(1,128)}', space=vmem, size = 0x9000, scoped, tag = 'internal scratch']
  %s0 = inlined_call_operand.hbm [shape: f32[16,64], index: 0, kind: input, shape index: {}]
  %s1 = inlined_call_operand.hbm [shape: f32[8,64,256], index: 1, kind: input, shape index: {}]
  %s2 = inlined_call_operand.hbm [shape: f32[8,16,256], index: 2, kind: output, shape index: {}]
  %s3 = sld [smem:[#allocation0]]
  $region49: #{tpu_custom_call.1} parent=0
    _
  %s5 = ssub.s32 1, %s3
  %s6 = scalar_select 0, %s5, %s3
  $region1: #{tpu_custom_call.1} parent=0
    #allocation2 [shape = 'u8[8192]{0}', space=vmem, size = 0x2000, scoped, tag = 'input window, operand 0, single buffered']
    #allocation3 [shape = 's32[2]{0}', space=sflag, size = 0x8, scoped, tag = 'scoped memory for tpu_custom_call.1']
    #allocation4 [shape = 's32[2]{0}', space=sflag, size = 0x8, scoped, tag = 'scoped memory for tpu_custom_call.1']
    #allocation5 [shape = 'u8[524288]{0}', space=vmem, size = 0x80000, scoped, tag = 'input window, operand 1']
    #allocation6 [shape = 's32[2]{0}', space=sflag, size = 0x8, scoped, tag = 'scoped memory for tpu_custom_call.1']
    #allocation7 [shape = 'u8[131072]{0}', space=vmem, size = 0x20000, scoped, tag = 'output window, operand 0']
    %7 = vsyncpa [#allocation3], 0
    %8 = vsyncpa [#allocation6], 0
    %s9 = scalar_lea.sflag [#allocation6], 1
    %10 = vsyncpa %s9, 0
    %11 = vsyncpa [#allocation4], 0
    %s12 = scalar_lea.sflag [#allocation4], 1
    %13 = vsyncpa %s12, 0
    loop: start=0, step=1, limit=4
    $region2: #{tpu_custom_call.1} parent=1 // loop_pre_header
      _
    $region3: #{tpu_custom_call.1} parent=1 // loop_header
      %s15 = sphi 0, %s19
      %p16 = scmp.ge.s32.totalorder %s15, 4
      %s22 = sphi 0, %s34
      %s23 = sphi 0, %s30
      %s24 = sphi 0, %s22
      %s25 = sphi 0, %s23
      %s26 = sphi 0, %s24
      %s27 = sphi 0, %s25
      %s35 = sphi 0, %s35
      %s37 = sphi 0, %s35
      %s38 = sphi 0, %s37
      %s52 = sphi 0, %s38
      %s60 = sphi 0, %s62
      %s63 = sphi 0, %s60
      %s64 = sphi 0, %s63
      %s80 = sphi 0, %s64
      %s88 = sphi 0, %s90
      %s91 = sphi 0, %s88
      %s92 = sphi 0, %s91
      %s108 = sphi 0, %s92
    $region4: #{tpu_custom_call.1} parent=1 // loop_header_branch
      %18 = sbr.rel (%p16) target = $region8
    $region5: #{tpu_custom_call.1} parent=1 // loop_body
      %s20 = ssub.s32 %s15, 1
      %s21 = ssub.s32 %s15, 2
      %s28 = sadd.s32 1, %s23
      %p29 = scmp.ge.s32.totalorder %s28, 1
      %s30 = scalar_select %p29, 0, %s28
      %s31 = sadd.s32 1, %s22
      %s32 = scalar_select %p29, %s31, %s22
      %p33 = scmp.ge.s32.totalorder %s32, 2
      %s34 = scalar_select %p33, 0, %s32
      %s36 = sadd.s32 %s35, 1
      %p39 = scmp.eq.s32.totalorder %s15, 1
      %p40 = scmp.ne.s32.totalorder %s35, %s37
      %p41 = scmp.eq.s32.totalorder %s15, 0
      %p42 = por %p40, %p41
      %p43 = scmp.ne.s32.totalorder %s35, %s37
      %p44 = scmp.eq.s32.totalorder %s20, 1
      %p45 = por %p43, %p44
      %p46 = scmp.ne.s32.totalorder %s37, %s38
      %p47 = scmp.eq.s32.totalorder %s20, 0
      %p48 = por %p46, %p47
      %p49 = scmp.ne.s32.totalorder %s37, %s38
      %p50 = scmp.eq.s32.totalorder %s21, 1
      %p51 = por %p49, %p50
      %p53 = scmp.ne.s32.totalorder %s38, %s52
      %p54 = scmp.eq.s32.totalorder %s21, 0
      %p55 = por %p53, %p54
      %s56 = ssub.s32 %s22, %s34
      %s57 = ssub.s32 %s23, %s30
      %s58 = sor.u32 %s56, %s57
      %p59 = scmp.eq.s32.totalorder %s58, 0
      %s61 = sadd.s32 %s60, 1
      %s62 = scalar_select %p59, %s60, %s61
      %p65 = pneg %p59
      %p66 = scmp.eq.s32.totalorder %s15, 1
      %p67 = por %p65, %p66
      %p68 = scmp.ne.s32.totalorder %s60, %s63
      %p69 = scmp.eq.s32.totalorder %s15, 0
      %p70 = por %p68, %p69
      %p71 = scmp.ne.s32.totalorder %s60, %s63
      %p72 = scmp.eq.s32.totalorder %s20, 1
      %p73 = por %p71, %p72
      %p74 = scmp.ne.s32.totalorder %s63, %s64
      %p75 = scmp.eq.s32.totalorder %s20, 0
      %p76 = por %p74, %p75
      %p77 = scmp.ne.s32.totalorder %s63, %s64
      %p78 = scmp.eq.s32.totalorder %s21, 1
      %p79 = por %p77, %p78
      %p81 = scmp.ne.s32.totalorder %s64, %s80
      %p82 = scmp.eq.s32.totalorder %s21, 0
      %p83 = por %p81, %p82
      %s84 = ssub.s32 %s22, %s34
      %s85 = ssub.s32 %s23, %s30
      %s86 = sor.u32 %s84, %s85
      %p87 = scmp.eq.s32.totalorder %s86, 0
      %s89 = sadd.s32 %s88, 1
      %s90 = scalar_select %p87, %s88, %s89
      %p93 = pneg %p87
      %p94 = scmp.eq.s32.totalorder %s15, 1
      %p95 = por %p93, %p94
      %p96 = scmp.ne.s32.totalorder %s88, %s91
      %p97 = scmp.eq.s32.totalorder %s15, 0
      %p98 = por %p96, %p97
      %p99 = scmp.ne.s32.totalorder %s88, %s91
      %p100 = scmp.eq.s32.totalorder %s20, 1
      %p101 = por %p99, %p100
      %p102 = scmp.ne.s32.totalorder %s91, %s92
      %p103 = scmp.eq.s32.totalorder %s20, 0
      %p104 = por %p102, %p103
      %p105 = scmp.ne.s32.totalorder %s91, %s92
      %p106 = scmp.eq.s32.totalorder %s21, 1
      %p107 = por %p105, %p106
      %p109 = scmp.ne.s32.totalorder %s92, %s108
      %p110 = scmp.eq.s32.totalorder %s21, 0
      %p111 = por %p109, %p110
      %p112 = scmp.le.s32.totalorder 1, %s15
      %p113 = scmp.lt.s32.totalorder %s15, 3
      %p114 = pnand %p112, %p113
      %p115 = pneg %p114
      // Predicated region
      $region9: #{tpu_custom_call.1} parent=5 // pred_check
        _
      $region10: #{tpu_custom_call.1} parent=5 // pred_check_branch
        %117 = sbr.rel (%p114) target = $region12
      $region11: #{tpu_custom_call.1} parent=5 // pred_region
        %s118 = ssub.s32 %s15, 1
        // Predicated region
        $region13: #{tpu_custom_call.1} parent=11 // pred_check
          %p119 = pneg %p48
        $region14: #{tpu_custom_call.1} parent=11 // pred_check_branch
          %121 = sbr.rel (%p119) target = $region16
        $region15: #{tpu_custom_call.1} parent=11 // pred_region
          %123 = vsyncadd [#allocation3], 0
          %s124 = sshll.u32 %s0, 4
          %s125 = int_to_ptr.hbm [resolvable:$true] %s124
          %s126 = sshll.u32 [#allocation2], 4
          %s127 = int_to_ptr.vmem [resolvable:$true] %s126
          %132 = dma.hbm_to_vmem [thread:$0]  %s125, 256, %s127, [#allocation3], 128, 128, 8
        $region16: #{tpu_custom_call.1} parent=11 // pred_fallthru
          _
      $region12: #{tpu_custom_call.1} parent=5 // pred_fallthru
        _
      %p133 = scmp.lt.s32.totalorder %s15, 2
      // Predicated region
      $region17: #{tpu_custom_call.1} parent=5 // pred_check
        %p134 = pneg %p133
      $region18: #{tpu_custom_call.1} parent=5 // pred_check_branch
        %136 = sbr.rel (%p134) target = $region20
      $region19: #{tpu_custom_call.1} parent=5 // pred_region
        // Predicated region
        $region21: #{tpu_custom_call.1} parent=19 // pred_check
          %p137 = pneg %p70
        $region22: #{tpu_custom_call.1} parent=19 // pred_check_branch
          %139 = sbr.rel (%p137) target = $region24
        $region23: #{tpu_custom_call.1} parent=19 // pred_region
          %s140 = sand.u32 %s60, 1
          %s141 = scalar_lea.sflag [#allocation6], %s140
          %s142 = sand.u32 %s60, 1
          %s143 = smul.addr %s142, 512
          %s144 = scalar_lea.vmem [#allocation5], %s143
          %s145 = smul.u32 4, %s22
          %s146 = smul.u32 2, %s23
          %148 = vsyncadd %s141, 0
          %s149 = smul.addr %s145, 16
          %s150 = sadd.s32 %s146, %s149
          %s151 = smul.addr %s150, 8
          %s152 = scalar_lea.hbm %s1, %s151
          %s153 = sshll.u32 %s152, 4
          %s154 = int_to_ptr.hbm [resolvable:$true] %s153
          %s155 = sshll.u32 %s144, 4
          %s156 = int_to_ptr.vmem [resolvable:$true] %s155
          %161 = dma.hbm_to_vmem [thread:$0]  %s154, 8192, %s156, %s141, 256, 256, 16
        $region24: #{tpu_custom_call.1} parent=19 // pred_fallthru
          _
      $region20: #{tpu_custom_call.1} parent=5 // pred_fallthru
        _
      %p162 = scmp.le.s32.totalorder 1, %s15
      %p163 = scmp.lt.s32.totalorder %s15, 3
      %p164 = pnand %p162, %p163
      %p165 = pneg %p164
      // Predicated region
      $region25: #{tpu_custom_call.1} parent=5 // pred_check
        _
      $region26: #{tpu_custom_call.1} parent=5 // pred_check_branch
        %167 = sbr.rel (%p164) target = $region28
      $region27: #{tpu_custom_call.1} parent=5 // pred_region
        %s168 = ssub.s32 %s15, 1
        // Predicated region
        $region29: #{tpu_custom_call.1} parent=27 // pred_check
          %p169 = pneg %p48
        $region30: #{tpu_custom_call.1} parent=27 // pred_check_branch
          %171 = sbr.rel (%p169) target = $region32
        $region31: #{tpu_custom_call.1} parent=27 // pred_region
          %173 = dma.done [#allocation3], 256
        $region32: #{tpu_custom_call.1} parent=27 // pred_fallthru
          _
        %s174 = sand.u32 %s63, 1
        %s175 = scalar_lea.sflag [#allocation6], %s174
        %s176 = sand.u32 %s63, 1
        %s177 = smul.addr %s176, 512
        %s178 = scalar_lea.vmem [#allocation5], %s177
        // Predicated region
        $region33: #{tpu_custom_call.1} parent=27 // pred_check
          %p179 = pneg %p76
        $region34: #{tpu_custom_call.1} parent=27 // pred_check_branch
          %181 = sbr.rel (%p179) target = $region36
        $region35: #{tpu_custom_call.1} parent=27 // pred_region
          %183 = dma.done %s175, 8192
        $region36: #{tpu_custom_call.1} parent=27 // pred_fallthru
          _
        %p184 = pneg %p48
        %p185 = pneg %p45
        %s186 = sand.u32 %s63, 1
        %s187 = scalar_lea.sflag [#allocation6], %s186
        %s188 = sand.u32 %s63, 1
        %s189 = smul.addr %s188, 512
        %s190 = scalar_lea.vmem [#allocation5], %s189
        %p191 = pneg %p76
        %p192 = pneg %p73
        %p193 = pneg %p104
        %p194 = pneg %p101
        %s195 = sand.u32 %s91, 1
        %s196 = scalar_lea.sflag [#allocation4], %s195
        %s197 = sand.u32 %s91, 1
        %s198 = smul.addr %s197, 128
        %s199 = scalar_lea.vmem [#allocation7], %s198
        %s200 = smul.u32 4, %s24
        %s201 = smul.u32 2, %s25
        %s202 = smul.u32 4, %s24
        %s203 = smul.u32 2, %s25
        %v204 = vld [vmem:[#allocation2] sm:$0xff]
        %v205 = vld [vmem:[#allocation2 + $0x8] sm:$0xff]
        %v206 = vld [vmem:[%s178] sm:$0xff]
        %v207 = vld [vmem:[%s178 + $0x8] sm:$0xff]
        %v208 = vld [vmem:[%s178 + $0x10] sm:$0xff]
        %v209 = vld [vmem:[%s178 + $0x18] sm:$0xff]
        %v210 = vld [vmem:[%s178 + $0x20] sm:$0xff]
        %v211 = vld [vmem:[%s178 + $0x28] sm:$0xff]
        %v212 = vld [vmem:[%s178 + $0x30] sm:$0xff]
        %v213 = vld [vmem:[%s178 + $0x38] sm:$0xff]
        %v214 = vld [vmem:[%s178 + $0x40] sm:$0xff]
        %v215 = vld [vmem:[%s178 + $0x48] sm:$0xff]
        %v216 = vld [vmem:[%s178 + $0x50] sm:$0xff]
        %v217 = vld [vmem:[%s178 + $0x58] sm:$0xff]
        %v218 = vld [vmem:[%s178 + $0x60] sm:$0xff]
        %v219 = vld [vmem:[%s178 + $0x68] sm:$0xff]
        %v220 = vld [vmem:[%s178 + $0x70] sm:$0xff]
        %v221 = vld [vmem:[%s178 + $0x78] sm:$0xff]
        %vm222 = vcmask 523264
        %v224 = vsel %vm222, %v204, 0
        %v227 = vsel %vm222, %v205, 0
        %229 = vmatpush.msra.mxu0 0.0
        %230 = vmatpush.msra.mxu0 0.0
        %231 = vmatpush.msra.mxu0 0.0
        %232 = vmatpush.msra.mxu0 0.0
        %233 = vmatpush.msra.mxu0 0.0
        %234 = vmatpush.msra.mxu0 0.0
        %235 = vmatpush.msra.mxu0 0.0
        %236 = vmatpush.msra.mxu0 0.0
        %237 = vmatpush.msra.mxu0 %v220
        %238 = vmatpush.msra.mxu0 %v218
        %239 = vmatpush.msra.mxu0 %v216
        %240 = vmatpush.msra.mxu0 %v214
        %241 = vmatpush.msra.mxu0 %v212
        %242 = vmatpush.msra.mxu0 %v210
        %243 = vmatpush.msra.mxu0 %v208
        %244 = vmatpush.msra.mxu0 %v206
        %245 = vmatmul.f32.gmra.mxu0 %v224
        %v246 = vpop.f32.mrf.mxu0
        %v247 = vadd.f32 0.0, %v246
        %248 = vmatmul.f32.gmra.mxu0 %v227
        %v249 = vpop.f32.mrf.mxu0
        %v250 = vadd.f32 0.0, %v249
        %251 = vdwg.mxu0
        %252 = vmatpush.msra.mxu0 0.0
        %253 = vmatpush.msra.mxu0 0.0
        %254 = vmatpush.msra.mxu0 0.0
        %255 = vmatpush.msra.mxu0 0.0
        %256 = vmatpush.msra.mxu0 0.0
        %257 = vmatpush.msra.mxu0 0.0
        %258 = vmatpush.msra.mxu0 0.0
        %259 = vmatpush.msra.mxu0 0.0
        %260 = vmatpush.msra.mxu0 %v221
        %261 = vmatpush.msra.mxu0 %v219
        %262 = vmatpush.msra.mxu0 %v217
        %263 = vmatpush.msra.mxu0 %v215
        %264 = vmatpush.msra.mxu0 %v213
        %265 = vmatpush.msra.mxu0 %v211
        %266 = vmatpush.msra.mxu0 %v209
        %267 = vmatpush.msra.mxu0 %v207
        %268 = vmatmul.f32.gmra.mxu0 %v224
        %v269 = vpop.f32.mrf.mxu0
        %v270 = vadd.f32 0.0, %v269
        %271 = vmatmul.f32.gmra.mxu0 %v227
        %v272 = vpop.f32.mrf.mxu0
        %v273 = vadd.f32 0.0, %v272
        %274 = vdwg.mxu0
        %275 = vst [vmem:[%s199] sm:$0xff] %v247
        %276 = vst [vmem:[%s199 + $0x8] sm:$0xff] %v270
        %277 = vst [vmem:[%s199 + $0x10] sm:$0xff] %v250
        %278 = vst [vmem:[%s199 + $0x18] sm:$0xff] %v273
        %s279 = scalar_lea.vmem %s178, 128 [#allocation5]
        %v280 = vld [vmem:[%s279] sm:$0xff]
        %v281 = vld [vmem:[%s279 + $0x8] sm:$0xff]
        %v282 = vld [vmem:[%s279 + $0x10] sm:$0xff]
        %v283 = vld [vmem:[%s279 + $0x18] sm:$0xff]
        %v284 = vld [vmem:[%s279 + $0x20] sm:$0xff]
        %v285 = vld [vmem:[%s279 + $0x28] sm:$0xff]
        %v286 = vld [vmem:[%s279 + $0x30] sm:$0xff]
        %v287 = vld [vmem:[%s279 + $0x38] sm:$0xff]
        %v288 = vld [vmem:[%s279 + $0x40] sm:$0xff]
        %v289 = vld [vmem:[%s279 + $0x48] sm:$0xff]
        %v290 = vld [vmem:[%s279 + $0x50] sm:$0xff]
        %v291 = vld [vmem:[%s279 + $0x58] sm:$0xff]
        %v292 = vld [vmem:[%s279 + $0x60] sm:$0xff]
        %v293 = vld [vmem:[%s279 + $0x68] sm:$0xff]
        %v294 = vld [vmem:[%s279 + $0x70] sm:$0xff]
        %v295 = vld [vmem:[%s279 + $0x78] sm:$0xff]
        %296 = vmatpush.msra.mxu0 0.0
        %297 = vmatpush.msra.mxu0 0.0
        %298 = vmatpush.msra.mxu0 0.0
        %299 = vmatpush.msra.mxu0 0.0
        %300 = vmatpush.msra.mxu0 0.0
        %301 = vmatpush.msra.mxu0 0.0
        %302 = vmatpush.msra.mxu0 0.0
        %303 = vmatpush.msra.mxu0 0.0
        %304 = vmatpush.msra.mxu0 %v294
        %305 = vmatpush.msra.mxu0 %v292
        %306 = vmatpush.msra.mxu0 %v290
        %307 = vmatpush.msra.mxu0 %v288
        %308 = vmatpush.msra.mxu0 %v286
        %309 = vmatpush.msra.mxu0 %v284
        %310 = vmatpush.msra.mxu0 %v282
        %311 = vmatpush.msra.mxu0 %v280
        %312 = vmatmul.f32.gmra.mxu0 %v224
        %v313 = vpop.f32.mrf.mxu0
        %v314 = vadd.f32 0.0, %v313
        %315 = vmatmul.f32.gmra.mxu0 %v227
        %v316 = vpop.f32.mrf.mxu0
        %v317 = vadd.f32 0.0, %v316
        %318 = vdwg.mxu0
        %319 = vmatpush.msra.mxu0 0.0
        %320 = vmatpush.msra.mxu0 0.0
        %321 = vmatpush.msra.mxu0 0.0
        %322 = vmatpush.msra.mxu0 0.0
        %323 = vmatpush.msra.mxu0 0.0
        %324 = vmatpush.msra.mxu0 0.0
        %325 = vmatpush.msra.mxu0 0.0
        %326 = vmatpush.msra.mxu0 0.0
        %327 = vmatpush.msra.mxu0 %v295
        %328 = vmatpush.msra.mxu0 %v293
        %329 = vmatpush.msra.mxu0 %v291
        %330 = vmatpush.msra.mxu0 %v289
        %331 = vmatpush.msra.mxu0 %v287
        %332 = vmatpush.msra.mxu0 %v285
        %333 = vmatpush.msra.mxu0 %v283
        %334 = vmatpush.msra.mxu0 %v281
        %335 = vmatmul.f32.gmra.mxu0 %v224
        %v336 = vpop.f32.mrf.mxu0
        %v337 = vadd.f32 0.0, %v336
        %338 = vmatmul.f32.gmra.mxu0 %v227
        %v339 = vpop.f32.mrf.mxu0
        %v340 = vadd.f32 0.0, %v339
        %341 = vdwg.mxu0
        %s342 = scalar_lea.vmem %s199, 32 [#allocation7]
        %343 = vst [vmem:[%s342] sm:$0xff] %v314
        %344 = vst [vmem:[%s342 + $0x8] sm:$0xff] %v337
        %345 = vst [vmem:[%s342 + $0x10] sm:$0xff] %v317
        %346 = vst [vmem:[%s342 + $0x18] sm:$0xff] %v340
        %s347 = scalar_lea.vmem %s178, 256 [#allocation5]
        %v348 = vld [vmem:[%s347] sm:$0xff]
        %v349 = vld [vmem:[%s347 + $0x8] sm:$0xff]
        %v350 = vld [vmem:[%s347 + $0x10] sm:$0xff]
        %v351 = vld [vmem:[%s347 + $0x18] sm:$0xff]
        %v352 = vld [vmem:[%s347 + $0x20] sm:$0xff]
        %v353 = vld [vmem:[%s347 + $0x28] sm:$0xff]
        %v354 = vld [vmem:[%s347 + $0x30] sm:$0xff]
        %v355 = vld [vmem:[%s347 + $0x38] sm:$0xff]
        %v356 = vld [vmem:[%s347 + $0x40] sm:$0xff]
        %v357 = vld [vmem:[%s347 + $0x48] sm:$0xff]
        %v358 = vld [vmem:[%s347 + $0x50] sm:$0xff]
        %v359 = vld [vmem:[%s347 + $0x58] sm:$0xff]
        %v360 = vld [vmem:[%s347 + $0x60] sm:$0xff]
        %v361 = vld [vmem:[%s347 + $0x68] sm:$0xff]
        %v362 = vld [vmem:[%s347 + $0x70] sm:$0xff]
        %v363 = vld [vmem:[%s347 + $0x78] sm:$0xff]
        %364 = vmatpush.msra.mxu0 0.0
        %365 = vmatpush.msra.mxu0 0.0
        %366 = vmatpush.msra.mxu0 0.0
        %367 = vmatpush.msra.mxu0 0.0
        %368 = vmatpush.msra.mxu0 0.0
        %369 = vmatpush.msra.mxu0 0.0
        %370 = vmatpush.msra.mxu0 0.0
        %371 = vmatpush.msra.mxu0 0.0
        %372 = vmatpush.msra.mxu0 %v362
        %373 = vmatpush.msra.mxu0 %v360
        %374 = vmatpush.msra.mxu0 %v358
        %375 = vmatpush.msra.mxu0 %v356
        %376 = vmatpush.msra.mxu0 %v354
        %377 = vmatpush.msra.mxu0 %v352
        %378 = vmatpush.msra.mxu0 %v350
        %379 = vmatpush.msra.mxu0 %v348
        %380 = vmatmul.f32.gmra.mxu0 %v224
        %v381 = vpop.f32.mrf.mxu0
        %v382 = vadd.f32 0.0, %v381
        %383 = vmatmul.f32.gmra.mxu0 %v227
        %v384 = vpop.f32.mrf.mxu0
        %v385 = vadd.f32 0.0, %v384
        %386 = vdwg.mxu0
        %387 = vmatpush.msra.mxu0 0.0
        %388 = vmatpush.msra.mxu0 0.0
        %389 = vmatpush.msra.mxu0 0.0
        %390 = vmatpush.msra.mxu0 0.0
        %391 = vmatpush.msra.mxu0 0.0
        %392 = vmatpush.msra.mxu0 0.0
        %393 = vmatpush.msra.mxu0 0.0
        %394 = vmatpush.msra.mxu0 0.0
        %395 = vmatpush.msra.mxu0 %v363
        %396 = vmatpush.msra.mxu0 %v361
        %397 = vmatpush.msra.mxu0 %v359
        %398 = vmatpush.msra.mxu0 %v357
        %399 = vmatpush.msra.mxu0 %v355
        %400 = vmatpush.msra.mxu0 %v353
        %401 = vmatpush.msra.mxu0 %v351
        %402 = vmatpush.msra.mxu0 %v349
        %403 = vmatmul.f32.gmra.mxu0 %v224
        %v404 = vpop.f32.mrf.mxu0
        %v405 = vadd.f32 0.0, %v404
        %406 = vmatmul.f32.gmra.mxu0 %v227
        %v407 = vpop.f32.mrf.mxu0
        %v408 = vadd.f32 0.0, %v407
        %409 = vdwg.mxu0
        %s410 = scalar_lea.vmem %s199, 64 [#allocation7]
        %411 = vst [vmem:[%s410] sm:$0xff] %v382
        %412 = vst [vmem:[%s410 + $0x8] sm:$0xff] %v405
        %413 = vst [vmem:[%s410 + $0x10] sm:$0xff] %v385
        %414 = vst [vmem:[%s410 + $0x18] sm:$0xff] %v408
        %s415 = scalar_lea.vmem %s178, 384 [#allocation5]
        %v416 = vld [vmem:[%s415] sm:$0xff]
        %v417 = vld [vmem:[%s415 + $0x8] sm:$0xff]
        %v418 = vld [vmem:[%s415 + $0x10] sm:$0xff]
        %v419 = vld [vmem:[%s415 + $0x18] sm:$0xff]
        %v420 = vld [vmem:[%s415 + $0x20] sm:$0xff]
        %v421 = vld [vmem:[%s415 + $0x28] sm:$0xff]
        %v422 = vld [vmem:[%s415 + $0x30] sm:$0xff]
        %v423 = vld [vmem:[%s415 + $0x38] sm:$0xff]
        %v424 = vld [vmem:[%s415 + $0x40] sm:$0xff]
        %v425 = vld [vmem:[%s415 + $0x48] sm:$0xff]
        %v426 = vld [vmem:[%s415 + $0x50] sm:$0xff]
        %v427 = vld [vmem:[%s415 + $0x58] sm:$0xff]
        %v428 = vld [vmem:[%s415 + $0x60] sm:$0xff]
        %v429 = vld [vmem:[%s415 + $0x68] sm:$0xff]
        %v430 = vld [vmem:[%s415 + $0x70] sm:$0xff]
        %v431 = vld [vmem:[%s415 + $0x78] sm:$0xff]
        %432 = vmatpush.msra.mxu0 0.0
        %433 = vmatpush.msra.mxu0 0.0
        %434 = vmatpush.msra.mxu0 0.0
        %435 = vmatpush.msra.mxu0 0.0
        %436 = vmatpush.msra.mxu0 0.0
        %437 = vmatpush.msra.mxu0 0.0
        %438 = vmatpush.msra.mxu0 0.0
        %439 = vmatpush.msra.mxu0 0.0
        %440 = vmatpush.msra.mxu0 %v430
        %441 = vmatpush.msra.mxu0 %v428
        %442 = vmatpush.msra.mxu0 %v426
        %443 = vmatpush.msra.mxu0 %v424
        %444 = vmatpush.msra.mxu0 %v422
        %445 = vmatpush.msra.mxu0 %v420
        %446 = vmatpush.msra.mxu0 %v418
        %447 = vmatpush.msra.mxu0 %v416
        %448 = vmatmul.f32.gmra.mxu0 %v224
        %v449 = vpop.f32.mrf.mxu0
        %v450 = vadd.f32 0.0, %v449
        %451 = vmatmul.f32.gmra.mxu0 %v227
        %v452 = vpop.f32.mrf.mxu0
        %v453 = vadd.f32 0.0, %v452
        %454 = vdwg.mxu0
        %455 = vmatpush.msra.mxu0 0.0
        %456 = vmatpush.msra.mxu0 0.0
        %457 = vmatpush.msra.mxu0 0.0
        %458 = vmatpush.msra.mxu0 0.0
        %459 = vmatpush.msra.mxu0 0.0
        %460 = vmatpush.msra.mxu0 0.0
        %461 = vmatpush.msra.mxu0 0.0
        %462 = vmatpush.msra.mxu0 0.0
        %463 = vmatpush.msra.mxu0 %v431
        %464 = vmatpush.msra.mxu0 %v429
        %465 = vmatpush.msra.mxu0 %v427
        %466 = vmatpush.msra.mxu0 %v425
        %467 = vmatpush.msra.mxu0 %v423
        %468 = vmatpush.msra.mxu0 %v421
        %469 = vmatpush.msra.mxu0 %v419
        %470 = vmatpush.msra.mxu0 %v417
        %471 = vmatmul.f32.gmra.mxu0 %v224
        %v472 = vpop.f32.mrf.mxu0
        %v473 = vadd.f32 0.0, %v472
        %474 = vmatmul.f32.gmra.mxu0 %v227
        %v475 = vpop.f32.mrf.mxu0
        %v476 = vadd.f32 0.0, %v475
        %477 = vdwg.mxu0
        %s478 = scalar_lea.vmem %s199, 96 [#allocation7]
        %479 = vst [vmem:[%s478] sm:$0xff] %v450
        %480 = vst [vmem:[%s478 + $0x8] sm:$0xff] %v473
        %481 = vst [vmem:[%s478 + $0x10] sm:$0xff] %v453
        %482 = vst [vmem:[%s478 + $0x18] sm:$0xff] %v476
        %s483 = sand.u32 %s91, 1
        %s484 = scalar_lea.sflag [#allocation4], %s483
        %s485 = sand.u32 %s91, 1
        %s486 = smul.addr %s485, 128
        %s487 = scalar_lea.vmem [#allocation7], %s486
        // Predicated region
        $region37: #{tpu_custom_call.1} parent=27 // pred_check
          %p488 = pneg %p101
        $region38: #{tpu_custom_call.1} parent=27 // pred_check_branch
          %490 = sbr.rel (%p488) target = $region40
        $region39: #{tpu_custom_call.1} parent=27 // pred_region
          %s491 = smul.u32 4, %s24
          %s492 = smul.u32 2, %s25
          %494 = vsyncadd %s484, 0
          %s495 = smul.addr %s491, 4
          %s496 = sadd.s32 %s492, %s495
          %s497 = smul.addr %s496, 8
          %s498 = scalar_lea.hbm %s2, %s497
          %s499 = sshll.u32 %s487, 4
          %s500 = int_to_ptr.vmem [resolvable:$true] %s499
          %s501 = sshll.u32 %s498, 4
          %s502 = int_to_ptr.hbm [resolvable:$true] %s501
          %507 = dma.vmem_to_hbm [thread:$0]  %s500, 2048, %s502, %s484, 256, 256, 16
        $region40: #{tpu_custom_call.1} parent=27 // pred_fallthru
          _
      $region28: #{tpu_custom_call.1} parent=5 // pred_fallthru
        _
      %p508 = scmp.le.s32.totalorder 2, %s15
      // Predicated region
      $region41: #{tpu_custom_call.1} parent=5 // pred_check
        %p509 = pneg %p508
      $region42: #{tpu_custom_call.1} parent=5 // pred_check_branch
        %511 = sbr.rel (%p509) target = $region44
      $region43: #{tpu_custom_call.1} parent=5 // pred_region
        %s512 = ssub.s32 %s15, 2
        // Predicated region
        $region45: #{tpu_custom_call.1} parent=43 // pred_check
          %p513 = pneg %p107
        $region46: #{tpu_custom_call.1} parent=43 // pred_check_branch
          %515 = sbr.rel (%p513) target = $region48
        $region47: #{tpu_custom_call.1} parent=43 // pred_region
          %s516 = sand.u32 %s92, 1
          %s517 = scalar_lea.sflag [#allocation4], %s516
          %s518 = sand.u32 %s92, 1
          %s519 = smul.addr %s518, 128
          %s520 = scalar_lea.vmem [#allocation7], %s519
          %522 = dma.done %s517, 2048
        $region48: #{tpu_custom_call.1} parent=43 // pred_fallthru
          _
      $region44: #{tpu_custom_call.1} parent=5 // pred_fallthru
        _
    $region6: #{tpu_custom_call.1} parent=1 // loop_footer
      %s19 = sadd.s32 1, %s15
    $region7: #{tpu_custom_call.1} parent=1 // loop_footer_branch
      %14 = sbr.rel target = $region3
    $region8: #{tpu_custom_call.1} parent=1 // loop_exit
      _
    %523 = vsyncpa [#allocation3], 1
    %s524 = scalar_lea.sflag [#allocation3], 1
    %525 = vsyncpa %s524, 1
    %526 = vsyncpa [#allocation6], 1
    %s527 = scalar_lea.sflag [#allocation6], 1
    %528 = vsyncpa %s527, 1
    %529 = vsyncpa [#allocation4], 1
    %s530 = scalar_lea.sflag [#allocation4], 1
    %531 = vsyncpa %s530, 1

</llo_original>
